<compile_context>
chip_gen: v7x
topology: tpu7x:2x2x1
jax: 0.10.0
libtpu: 0.0.40
codegen_flags: <defaults>
</compile_context>

<pallas_src>
import functools

import jax
import jax.numpy as jnp
import numpy as np
from jax import lax
from jax.experimental import pallas as pl
from jax.experimental.pallas import tpu as pltpu


_DEF_TARGET_STEPS = 8   # aim for >= 8 grid steps (even count -> v7x 2-TC sharding)


def _round_up(a, b):
    return (a + b - 1) // b * b


def _sublane_multiple(dtype):
    itemsize = jnp.dtype(dtype).itemsize
    return {4: 8, 2: 16, 1: 32}.get(itemsize, 8)


def _vmem_config():
    """Per-generation VMEM budgets (bytes), with a conservative fallback."""
    try:
        vmem = pltpu.get_tpu_info().vmem_capacity_bytes
    except Exception:            # info unavailable (e.g. interpret mode)
        vmem = 64 * 1024 * 1024  # assume the tightest (v7x-class) budget
    if vmem >= 96 * 1024 * 1024:
        # v5e / v6e class (128 MiB physical VMEM): large blocks are free.
        return {"limit": 64 * 1024 * 1024,
                "ew_block": 8 * 1024 * 1024,
                "win_block": 2 * 1024 * 1024}
    # v7x class (64 MiB physical per TensorCore): keep blocks small enough for
    # 4 double-buffered I/O blocks plus ~5 tile-sized f32 temporaries in the
    # windowed kernel.
    return {"limit": 40 * 1024 * 1024,
            "ew_block": 2 * 1024 * 1024,
            "win_block": 1 * 1024 * 1024}


def _pick_row_tile(rows, lane, dtype, block_bytes, target_steps=_DEF_TARGET_STEPS):
    """Row-tile size: big enough to amortise the ~0.35us per-step overhead,
    small enough to (a) fit `block_bytes` per buffer and (b) give >=
    target_steps grid steps (DMA/compute overlap, v7x megacore sharding)."""
    itemsize = jnp.dtype(dtype).itemsize
    mult = _sublane_multiple(dtype)
    if rows <= mult:
        return rows                       # tiny input: full extent (always legal)
    cap = max(mult, (block_bytes // (lane * itemsize)) // mult * mult)
    target = max(mult, _round_up(pl.cdiv(rows, target_steps), mult))
    tr = min(cap, target, (rows // mult) * mult)
    return max(tr, mult)


def _div_scale(base, beta):
    """base ** (-beta); common betas specialised away from pow (log+exp)."""
    if beta == 0.75:                      # module default
        r = lax.rsqrt(base)
        return r * jnp.sqrt(r)            # base^-0.5 * base^-0.25
    if beta == 0.5:
        return lax.rsqrt(base)
    if beta == 1.0:
        return 1.0 / base
    return jnp.power(base, -beta)


def _shift_zero_fill(v, off):
    """shifted[..., i] = v[..., i + off], 0 where i + off is out of range.
    Static lane shift via slice + concat with a zero slab (no iota/compares)."""
    L = v.shape[-1]
    if off == 0:
        return v
    if abs(off) >= L:
        return jnp.zeros_like(v)
    zeros = jnp.zeros(v.shape[:-1] + (abs(off),), v.dtype)
    if off > 0:
        return jnp.concatenate([v[..., off:], zeros], axis=-1)
    return jnp.concatenate([zeros, v[..., :L + off]], axis=-1)


def _lrn_elementwise_kernel(x_ref, o_ref, *, alpha, beta):
    # local_size == 1 fast path: y = x * (alpha * x^2 + 1) ** (-beta)
    x = x_ref[...].astype(jnp.float32)
    o_ref[...] = (x * _div_scale(x * x * alpha + 1.0, beta)).astype(o_ref.dtype)


def _lrn_window_kernel(x_ref, o_ref, *, local_size, alpha, beta):
    # Windowed path: AvgPool1d(k=local_size, stride=1, zero pad,
    # count_include_pad=True).  The lane axis is zero-padded to a 128 multiple
    # in the wrapper, so zero-fill shifts reproduce the zero padding exactly.
    xin = x_ref[...].astype(jnp.float32)
    sq = xin * xin                        # only sq is carried across the loop
    pad = (local_size - 1) // 2
    win = sq
    for off in range(1, pad + 1):
        win = win + _shift_zero_fill(sq, off) + _shift_zero_fill(sq, -off)
    base = win * (alpha / float(local_size)) + 1.0   # count_include_pad=True
    # Re-read x for the final multiply instead of keeping the f32 upcast live
    # across the shift loop (halves live footprint for bf16 inputs).
    x = x_ref[...].astype(jnp.float32)
    o_ref[...] = (x * _div_scale(base, beta)).astype(o_ref.dtype)


def _run(kernel, xf, tile_rows, lane, vmem_limit):
    rows = xf.shape[0]
    grid = (pl.cdiv(rows, tile_rows),)
    return pl.pallas_call(
        kernel,
        out_shape=jax.ShapeDtypeStruct((rows, lane), xf.dtype),
        grid_spec=pltpu.PrefetchScalarGridSpec(
            num_scalar_prefetch=0,
            grid=grid,
            in_specs=[pl.BlockSpec((tile_rows, lane), lambda i: (i, 0))],
            out_specs=pl.BlockSpec((tile_rows, lane), lambda i: (i, 0)),
        ),
        compiler_params=pltpu.CompilerParams(
            dimension_semantics=("parallel",),
            vmem_limit_bytes=vmem_limit),
    )(xf)


def lrn_forward(x, local_size=1, alpha=1.0, beta=0.75):
    """x: (N, C, L) float array. Returns same shape/dtype."""
    assert local_size % 2 == 1, "only odd local_size keeps output length == L"
    N, C, L = x.shape
    dtype = x.dtype
    cfg = _vmem_config()

    if local_size == 1:
        # Purely elementwise: flatten to the widest lane-dense slab that
        # divides evenly; otherwise zero-pad to a 128 multiple (unmasked
        # stores) and slice the result.
        total = N * C * L
        lane = None
        for w in (8192, 4096, 2048, 1024, 512, 256, 128):
            if total % w == 0:
                lane = w
                break
        if lane is None:
            lane = 128
            padded = _round_up(total, lane)
            xf = jnp.pad(x.reshape(-1), (0, padded - total))
        else:
            padded = total
            xf = x.reshape(-1)
        rows = padded // lane
        xf = xf.reshape(rows, lane)
        tr = _pick_row_tile(rows, lane, dtype, cfg["ew_block"])
        kernel = functools.partial(_lrn_elementwise_kernel, alpha=alpha, beta=beta)
        out = _run(kernel, xf, tr, lane, cfg["limit"])
        return out.reshape(-1)[:total].reshape(N, C, L)

    # General windowed path: (N*C, L), lane axis zero-padded to a 128 multiple.
    rows = N * C
    Lp = _round_up(L, 128)
    xf = x.reshape(rows, L)
    if Lp != L:
        xf = jnp.pad(xf, ((0, 0), (0, Lp - L)))
    tr = _pick_row_tile(rows, Lp, dtype, cfg["win_block"])
    kernel = functools.partial(_lrn_window_kernel, local_size=local_size,
                               alpha=alpha, beta=beta)
    out = _run(kernel, xf, tr, Lp, cfg["limit"])
    if Lp != L:
        out = out[:, :L]
    return out.reshape(N, C, L)


def lrn_reference(x, local_size=1, alpha=1.0, beta=0.75):
    # Pure-JAX reference mirroring PyTorch AvgPool1d (count_include_pad=True).
    pad = (local_size - 1) // 2
    sq = x * x
    sq_p = jnp.pad(sq, ((0, 0), (0, 0), (pad, pad)))
    L = x.shape[-1]
    win = sum(sq_p[..., i:i + L] for i in range(local_size)) / local_size
    div = jnp.power(win * alpha + 1.0, beta)
    return x / div


if __name__ == "__main__":
    key = jax.random.PRNGKey(0)
    k0, k1 = jax.random.split(key)

    # N=2, C=4, L=128 (AvgPool1d-style NCL input)
    x = jax.random.normal(k0, (2, 4, 128), dtype=jnp.float32)

    # Default module config (local_size=1): lane-dense elementwise fast path.
    y1 = jax.block_until_ready(lrn_forward(x, local_size=1, alpha=1.0, beta=0.75))
    np.testing.assert_allclose(
        np.asarray(y1), np.asarray(lrn_reference(x, 1, 1.0, 0.75)),
        rtol=1e-5, atol=1e-5)

    # General windowed path (odd local_size > 1), L already a 128 multiple.
    y3 = jax.block_until_ready(lrn_forward(x, local_size=3, alpha=1e-4, beta=0.75))
    np.testing.assert_allclose(
        np.asarray(y3), np.asarray(lrn_reference(x, 3, 1e-4, 0.75)),
        rtol=1e-5, atol=1e-5)

    # Ragged L (not a 128 multiple): exercises the wrapper-side lane padding.
    x2 = jax.random.normal(k1, (2, 4, 100), dtype=jnp.float32)
    y5 = jax.block_until_ready(lrn_forward(x2, local_size=5, alpha=2e-4, beta=0.75))
    np.testing.assert_allclose(
        np.asarray(y5), np.asarray(lrn_reference(x2, 5, 2e-4, 0.75)),
        rtol=1e-5, atol=1e-5)

    print("KERNEL_OK")
</pallas_src>

<mosaic_0001>
module attributes {stable_mosaic.version = 11 : i64} {
  func.func @_lrn_elementwise_kernel(%arg0: i32, %arg1: memref<1x1024xf32, #tpu.memory_space<vmem>>, %arg2: memref<1x1024xf32, #tpu.memory_space<vmem>>) attributes {dimension_semantics = [#tpu.dimension_semantics<parallel>], iteration_bounds = array<i64: 1>, scalar_prefetch = 0 : i64, scratch_operands = 0 : i64, tpu.core_type = #tpu.core_type<tc>, window_params = [{transform_indices = @transform_0, window_bounds = array<i64: 1, 1024>}, {transform_indices = @transform_1, window_bounds = array<i64: 1, 1024>}]} {
    %c0 = arith.constant 0 : index
    %c0_0 = arith.constant 0 : index
    %0 = vector.load %arg1[%c0, %c0_0] : memref<1x1024xf32, #tpu.memory_space<vmem>>, vector<1x1024xf32>
    %1 = arith.mulf %0, %0 : vector<1x1024xf32>
    %cst = arith.constant 1.000000e+00 : f32
    %2 = vector.broadcast %cst : f32 to vector<1x1024xf32>
    %3 = arith.mulf %1, %2 : vector<1x1024xf32>
    %cst_1 = arith.constant 1.000000e+00 : f32
    %4 = vector.broadcast %cst_1 : f32 to vector<1x1024xf32>
    %5 = arith.addf %3, %4 : vector<1x1024xf32>
    %6 = math.rsqrt %5 : vector<1x1024xf32>
    %7 = math.sqrt %6 : vector<1x1024xf32>
    %8 = arith.mulf %6, %7 : vector<1x1024xf32>
    %9 = arith.mulf %0, %8 : vector<1x1024xf32>
    %c0_2 = arith.constant 0 : index
    %c0_3 = arith.constant 0 : index
    %10 = vector.load %arg2[%c0_2, %c0_3] : memref<1x1024xf32, #tpu.memory_space<vmem>>, vector<1x1024xf32>
    tpu.vector_store %arg2[%c0_2, %c0_3], %9 {strides = array<i32>} : memref<1x1024xf32, #tpu.memory_space<vmem>>, vector<1x1024xf32>,
    return
  }
  func.func @transform_0(%arg0: i32) -> (i32, i32) {
    %c0_i32 = arith.constant 0 : i32
    %c0_i32_0 = arith.constant 0 : i32
    return %arg0, %c0_i32 : i32, i32
  }
  func.func @transform_1(%arg0: i32) -> (i32, i32) {
    %c0_i32 = arith.constant 0 : i32
    %c0_i32_0 = arith.constant 0 : i32
    return %arg0, %c0_i32 : i32, i32
  }
}

</mosaic_0001>

<llo_original>
// kernel: tpu_custom_call.1
$region0: #{tpu_custom_call.1}
  #allocation0 [shape = 'u32[]', space=smem, size = 0x4, offset = 0x4, fixed_abs, tag = 'smem constant byte address 0x4 - core index']
  #allocation1 [shape = 'u32[144,128]{1,0:T(1,128)}', space=vmem, size = 0x12000, scoped, tag = 'internal scratch']
  %s0 = inlined_call_operand.hbm [shape: f32[1,1024], index: 0, kind: input, shape index: {}]
  %s1 = inlined_call_operand.hbm [shape: f32[1,1024], index: 1, kind: output, shape index: {}]
  %s2 = sld [smem:[#allocation0]]
  $region18: #{tpu_custom_call.1} parent=0
    _
  %s4 = ssub.s32 1, %s2
  %s5 = scalar_select 0, %s4, %s2
  $region1: #{tpu_custom_call.1} parent=0
    #allocation2 [shape = 'u8[4096]{0}', space=vmem, size = 0x1000, scoped, tag = 'input window, operand 0, single buffered']
    #allocation3 [shape = 's32[1]{0}', space=sflag, size = 0x4, scoped, tag = 'scoped memory for tpu_custom_call.1']
    #allocation4 [shape = 's32[1]{0}', space=sflag, size = 0x4, scoped, tag = 'scoped memory for tpu_custom_call.1']
    #allocation5 [shape = 'u8[4096]{0}', space=vmem, size = 0x1000, scoped, tag = 'output window, operand 0, single buffered']
    %6 = vsyncpa [#allocation3], 0
    %7 = vsyncpa [#allocation4], 0
    // Predicated region
    $region2: #{tpu_custom_call.1} parent=1 // pred_check
      _
    $region3: #{tpu_custom_call.1} parent=1 // pred_check_branch
      %9 = sbr.rel (0) target = $region5
    $region4: #{tpu_custom_call.1} parent=1 // pred_region
      %s11 = ssub.s32 128, 128
      %12 = vsyncadd [#allocation3], %s11
      %s14 = sshll.u32 [#allocation2], 4
      %s15 = int_to_ptr.vmem [resolvable:$true] %s14
      %17 = dma.hbm_to_vmem [thread:$0]  %s0, 128, %s15, [#allocation3]
    $region5: #{tpu_custom_call.1} parent=1 // pred_fallthru
      _
    // Predicated region
    $region6: #{tpu_custom_call.1} parent=1 // pred_check
      _
    $region7: #{tpu_custom_call.1} parent=1 // pred_check_branch
      %19 = sbr.rel (0) target = $region9
    $region8: #{tpu_custom_call.1} parent=1 // pred_region
      %20 = dma.done [#allocation3], 128
    $region9: #{tpu_custom_call.1} parent=1 // pred_fallthru
      _
    %v21 = vld [vmem:[#allocation2] sm:$0xff]
    %v22 = vmul.f32 %v21, %v21
    %v23 = vadd.f32 %v22, 1.0
    %v24 = vrsqrt.pop %v23
    %v25 = vrsqrt.pop %v24
    %v26 = vmul.f32 %v24, %v25
    %vm27 = vcmp.eq.f32.partialorder %v24, inf
    %v28 = vsel %vm27, %v24, %v26
    %vm29 = vcmp.eq.f32.partialorder %v24, 0.0
    %v30 = vand.u32 %v24, 2147483648
    %v31 = vsel %vm29, %v30, %v28
    %v32 = vmul.f32 %v24, %v31
    %v33 = vmul.f32 %v21, %v32
    %34 = vst [vmem:[#allocation5] sm:$0xff] %v33
    // Predicated region
    $region10: #{tpu_custom_call.1} parent=1 // pred_check
      _
    $region11: #{tpu_custom_call.1} parent=1 // pred_check_branch
      %36 = sbr.rel (0) target = $region13
    $region12: #{tpu_custom_call.1} parent=1 // pred_region
      %s38 = ssub.s32 128, 128
      %39 = vsyncadd [#allocation4], %s38
      %s41 = sshll.u32 [#allocation5], 4
      %s42 = int_to_ptr.vmem [resolvable:$true] %s41
      %44 = dma.vmem_to_hbm [thread:$0]  %s42, 128, %s1, [#allocation4]
    $region13: #{tpu_custom_call.1} parent=1 // pred_fallthru
      _
    // Predicated region
    $region14: #{tpu_custom_call.1} parent=1 // pred_check
      _
    $region15: #{tpu_custom_call.1} parent=1 // pred_check_branch
      %46 = sbr.rel (0) target = $region17
    $region16: #{tpu_custom_call.1} parent=1 // pred_region
      %47 = dma.done [#allocation4], 128
    $region17: #{tpu_custom_call.1} parent=1 // pred_fallthru
      _
    %48 = vsyncpa [#allocation3], 1
    %49 = vsyncpa [#allocation4], 1

</llo_original>
